<compile_context>
chip_gen: v5e
topology: v5e:2x2
jax: 0.10.0
libtpu: 0.0.40
codegen_flags: <defaults>
</compile_context>

<pallas_src>
import math

import jax
import jax.numpy as jnp
from jax.experimental import pallas as pl
from jax.experimental.pallas import tpu as pltpu


def _round_up(n, m):
    return ((n + m - 1) // m) * m


def prior_disc_kernel(x_ref, w0_ref, b0_ref, w1_ref, b1_ref, w2_ref, b2_ref,
                      o_ref):
    # Layer 0: [TILE_B, E] @ [E, H0] on the MXU (bf16 in, f32 accumulate).
    x = x_ref[...].astype(jnp.bfloat16)
    h = jnp.dot(x, w0_ref[...], preferred_element_type=jnp.float32)
    h = jnp.maximum(h + b0_ref[...], 0.0)

    # Layer 1: [TILE_B, H0] @ [H0, H1] on the MXU.
    h = jnp.dot(h.astype(jnp.bfloat16), w1_ref[...],
                preferred_element_type=jnp.float32)
    h = jnp.maximum(h + b1_ref[...], 0.0)

    # Layer 2 (out features = 1): VPU/XLU row reduce instead of a degenerate
    # N=1 MXU matmul; b2 is a scalar read from SMEM.
    logit = jnp.sum(h * w2_ref[...], axis=-1) + b2_ref[0]          # (TILE_B,)
    # Lane-dense (1, TILE_B) output slab (unmasked stores).
    o_ref[...] = jax.nn.sigmoid(logit).reshape(1, -1).astype(o_ref.dtype)


def prior_discriminator(x, params, *, tile_b=512):
    """x: [B, E_size] float32 -> [B, 1] float32 sigmoid scores."""
    w0, b0, w1, b1, w2, b2 = params
    B, E = x.shape
    H0 = w0.shape[1]
    H1 = w1.shape[1]

    # MXU-facing weights in bf16 (halves HBM/DMA bytes too); everything that
    # feeds the VPU epilogue stays f32.
    w0 = w0.astype(jnp.bfloat16)
    w1 = w1.astype(jnp.bfloat16)
    w2_row = w2.reshape(1, H1).astype(jnp.float32)   # row vector for the reduce
    b2_s = b2.reshape(1).astype(jnp.float32)         # scalar -> SMEM

    # Pick a batch tile: multiple of 128 (lane-dense output), capped by B.
    tile_b = min(tile_b, _round_up(B, 128))
    b_pad = _round_up(B, tile_b)
    if b_pad != B:
        x = jnp.pad(x, ((0, b_pad - B), (0, 0)))
    grid = (b_pad // tile_b,)

    def resident(shape):
        # Full-array block with constant index map -> stays in VMEM across steps.
        return pl.BlockSpec(shape, lambda i: (0, 0))

    out = pl.pallas_call(
        prior_disc_kernel,
        out_shape=jax.ShapeDtypeStruct((1, b_pad), jnp.float32),
        grid=grid,
        in_specs=[
            pl.BlockSpec((tile_b, E), lambda i: (i, 0)),        # x: tiled batch
            resident((E, H0)),                                  # W0 (bf16)
            resident((1, H0)),                                  # b0
            resident((H0, H1)),                                 # W1 (bf16)
            resident((1, H1)),                                  # b1
            resident((1, H1)),                                  # w2 row (f32)
            pl.BlockSpec(memory_space=pltpu.MemorySpace.SMEM),  # b2 scalar
        ],
        out_specs=pl.BlockSpec((1, tile_b), lambda i: (0, i)),  # lane-dense slab
        compiler_params=pltpu.CompilerParams(
            dimension_semantics=("parallel",)),
    )(x, w0, b0, w1, b1, w2_row, b2_s)

    return out[0, :B].reshape(B, 1)


def init_params(key, e_size, interm_size=(256, 128)):
    """Deterministic init mimicking torch.nn.Linear default (U[-1/sqrt(fan_in), +])."""
    sizes = [(e_size, interm_size[0]),
             (interm_size[0], interm_size[1]),
             (interm_size[1], 1)]
    params = []
    keys = jax.random.split(key, 2 * len(sizes))
    for i, (fan_in, fan_out) in enumerate(sizes):
        bound = 1.0 / math.sqrt(fan_in)
        w = jax.random.uniform(keys[2 * i], (fan_in, fan_out),
                               minval=-bound, maxval=bound, dtype=jnp.float32)
        b = jax.random.uniform(keys[2 * i + 1], (1, fan_out),
                               minval=-bound, maxval=bound, dtype=jnp.float32)
        params += [w, b]
    return tuple(params)


def reference(x, params):
    w0, b0, w1, b1, w2, b2 = params
    h = jax.nn.relu(x @ w0 + b0)
    h = jax.nn.relu(h @ w1 + b1)
    return jax.nn.sigmoid(h @ w2 + b2)


if __name__ == "__main__":
    B, E_SIZE = 8, 32
    INTERM = (256, 128)

    key = jax.random.PRNGKey(0)
    kx, kp, kx2 = jax.random.split(key, 3)
    x = jax.random.normal(kx, (B, E_SIZE), dtype=jnp.float32)
    params = init_params(kp, E_SIZE, INTERM)

    out = jax.block_until_ready(prior_discriminator(x, params))
    ref = reference(x, params)
    assert out.shape == (B, 1), out.shape
    err = float(jnp.max(jnp.abs(out - ref)))
    # bf16 matmul inputs -> loosened tolerance vs the f32 reference.
    assert err < 2e-2, f"mismatch: max abs err {err}"

    # Exercise the multi-tile grid + padded-batch path (B not a tile multiple).
    B2 = 300
    x2 = jax.random.normal(kx2, (B2, E_SIZE), dtype=jnp.float32)
    out2 = jax.block_until_ready(prior_discriminator(x2, params, tile_b=128))
    ref2 = reference(x2, params)
    assert out2.shape == (B2, 1), out2.shape
    err2 = float(jnp.max(jnp.abs(out2 - ref2)))
    assert err2 < 2e-2, f"mismatch (tiled): max abs err {err2}"

    print("KERNEL_OK")
</pallas_src>

<mosaic_0001>
module attributes {stable_mosaic.version = 11 : i64} {
  func.func @prior_disc_kernel(%arg0: i32, %arg1: memref<128x32xf32, #tpu.memory_space<vmem>>, %arg2: memref<32x256xbf16, #tpu.memory_space<vmem>>, %arg3: memref<1x256xf32, #tpu.memory_space<vmem>>, %arg4: memref<256x128xbf16, #tpu.memory_space<vmem>>, %arg5: memref<1x128xf32, #tpu.memory_space<vmem>>, %arg6: memref<1x128xf32, #tpu.memory_space<vmem>>, %arg7: memref<1xf32, #tpu.memory_space<smem>>, %arg8: memref<1x128xf32, #tpu.memory_space<vmem>>) attributes {dimension_semantics = [#tpu.dimension_semantics<parallel>], iteration_bounds = array<i64: 1>, scalar_prefetch = 0 : i64, scratch_operands = 0 : i64, tpu.core_type = #tpu.core_type<tc>, window_params = [{transform_indices = @transform_0, window_bounds = array<i64: 128, 32>}, {pipeline_mode = #tpu.pipeline_mode<synchronous>, transform_indices = @transform_1, window_bounds = array<i64: 32, 256>}, {pipeline_mode = #tpu.pipeline_mode<synchronous>, transform_indices = @transform_2, window_bounds = array<i64: 1, 256>}, {pipeline_mode = #tpu.pipeline_mode<synchronous>, transform_indices = @transform_3, window_bounds = array<i64: 256, 128>}, {pipeline_mode = #tpu.pipeline_mode<synchronous>, transform_indices = @transform_4, window_bounds = array<i64: 1, 128>}, {pipeline_mode = #tpu.pipeline_mode<synchronous>, transform_indices = @transform_5, window_bounds = array<i64: 1, 128>}, {transform_indices = @transform_6, window_bounds = array<i64: 1>}, {transform_indices = @transform_7, window_bounds = array<i64: 1, 128>}]} {
    %c0 = arith.constant 0 : index
    %c0_0 = arith.constant 0 : index
    %0 = vector.load %arg1[%c0, %c0_0] : memref<128x32xf32, #tpu.memory_space<vmem>>, vector<128x32xf32>
    %1 = arith.truncf %0 : vector<128x32xf32> to vector<128x32xbf16>
    %c0_1 = arith.constant 0 : index
    %c0_2 = arith.constant 0 : index
    %2 = vector.load %arg2[%c0_1, %c0_2] : memref<32x256xbf16, #tpu.memory_space<vmem>>, vector<32x256xbf16>
    %cst = arith.constant dense<0.000000e+00> : vector<128x256xf32>
    %3 = tpu.matmul %1, %2, %cst {dimension_numbers = #tpu.dot_dimension_numbers<[1], [0], [0], [1], [0, 0, 1, 1], [], []>} : vector<128x32xbf16>, vector<32x256xbf16>, vector<128x256xf32> -> vector<128x256xf32>
    %c0_3 = arith.constant 0 : index
    %c0_4 = arith.constant 0 : index
    %4 = vector.load %arg3[%c0_3, %c0_4] : memref<1x256xf32, #tpu.memory_space<vmem>>, vector<1x256xf32>
    %5 = vector.broadcast %4 : vector<1x256xf32> to vector<128x256xf32>
    %6 = arith.addf %3, %5 : vector<128x256xf32>
    %cst_5 = arith.constant 0.000000e+00 : f32
    %7 = vector.broadcast %cst_5 : f32 to vector<128x256xf32>
    %8 = arith.maximumf %6, %7 : vector<128x256xf32>
    %9 = arith.truncf %8 : vector<128x256xf32> to vector<128x256xbf16>
    %c0_6 = arith.constant 0 : index
    %c0_7 = arith.constant 0 : index
    %10 = vector.load %arg4[%c0_6, %c0_7] : memref<256x128xbf16, #tpu.memory_space<vmem>>, vector<256x128xbf16>
    %cst_8 = arith.constant dense<0.000000e+00> : vector<128x128xf32>
    %11 = tpu.matmul %9, %10, %cst_8 {dimension_numbers = #tpu.dot_dimension_numbers<[1], [0], [0], [1], [0, 0, 1, 1], [], []>} : vector<128x256xbf16>, vector<256x128xbf16>, vector<128x128xf32> -> vector<128x128xf32>
    %c0_9 = arith.constant 0 : index
    %c0_10 = arith.constant 0 : index
    %12 = vector.load %arg5[%c0_9, %c0_10] : memref<1x128xf32, #tpu.memory_space<vmem>>, vector<1x128xf32>
    %13 = vector.broadcast %12 : vector<1x128xf32> to vector<128x128xf32>
    %14 = arith.addf %11, %13 : vector<128x128xf32>
    %cst_11 = arith.constant 0.000000e+00 : f32
    %15 = vector.broadcast %cst_11 : f32 to vector<128x128xf32>
    %16 = arith.maximumf %14, %15 : vector<128x128xf32>
    %c0_12 = arith.constant 0 : index
    %c0_13 = arith.constant 0 : index
    %17 = vector.load %arg6[%c0_12, %c0_13] : memref<1x128xf32, #tpu.memory_space<vmem>>, vector<1x128xf32>
    %18 = vector.broadcast %17 : vector<1x128xf32> to vector<128x128xf32>
    %19 = arith.mulf %16, %18 : vector<128x128xf32>
    %cst_14 = arith.constant dense<0.000000e+00> : vector<128xf32>
    %20 = vector.multi_reduction <add>, %19, %cst_14 [1] : vector<128x128xf32> to vector<128xf32>
    %c0_15 = arith.constant 0 : index
    %21 = memref.load %arg7[%c0_15] : memref<1xf32, #tpu.memory_space<smem>>
    %22 = vector.broadcast %21 : f32 to vector<128xf32>
    %23 = arith.addf %20, %22 : vector<128xf32>
    %24 = arith.negf %23 : vector<128xf32>
    %25 = math.exp %24 : vector<128xf32>
    %cst_16 = arith.constant 1.000000e+00 : f32
    %26 = vector.broadcast %cst_16 : f32 to vector<128xf32>
    %27 = arith.addf %26, %25 : vector<128xf32>
    %28 = arith.divf %26, %27 : vector<128xf32>
    %29 = vector.shape_cast %28 : vector<128xf32> to vector<1x128xf32>
    %c0_17 = arith.constant 0 : index
    %c0_18 = arith.constant 0 : index
    %30 = vector.load %arg8[%c0_17, %c0_18] : memref<1x128xf32, #tpu.memory_space<vmem>>, vector<1x128xf32>
    tpu.vector_store %arg8[%c0_17, %c0_18], %29 {strides = array<i32>} : memref<1x128xf32, #tpu.memory_space<vmem>>, vector<1x128xf32>,
    return
  }
  func.func @transform_0(%arg0: i32) -> (i32, i32) {
    %c0_i32 = arith.constant 0 : i32
    %c0_i32_0 = arith.constant 0 : i32
    return %arg0, %c0_i32 : i32, i32
  }
  func.func @transform_1(%arg0: i32) -> (i32, i32) {
    %c0_i32 = arith.constant 0 : i32
    %c0_i32_0 = arith.constant 0 : i32
    %c0_i32_1 = arith.constant 0 : i32
    return %c0_i32, %c0_i32_0 : i32, i32
  }
  func.func @transform_2(%arg0: i32) -> (i32, i32) {
    %c0_i32 = arith.constant 0 : i32
    %c0_i32_0 = arith.constant 0 : i32
    %c0_i32_1 = arith.constant 0 : i32
    return %c0_i32, %c0_i32_0 : i32, i32
  }
  func.func @transform_3(%arg0: i32) -> (i32, i32) {
    %c0_i32 = arith.constant 0 : i32
    %c0_i32_0 = arith.constant 0 : i32
    %c0_i32_1 = arith.constant 0 : i32
    return %c0_i32, %c0_i32_0 : i32, i32
  }
  func.func @transform_4(%arg0: i32) -> (i32, i32) {
    %c0_i32 = arith.constant 0 : i32
    %c0_i32_0 = arith.constant 0 : i32
    %c0_i32_1 = arith.constant 0 : i32
    return %c0_i32, %c0_i32_0 : i32, i32
  }
  func.func @transform_5(%arg0: i32) -> (i32, i32) {
    %c0_i32 = arith.constant 0 : i32
    %c0_i32_0 = arith.constant 0 : i32
    %c0_i32_1 = arith.constant 0 : i32
    return %c0_i32, %c0_i32_0 : i32, i32
  }
  func.func @transform_6(%arg0: i32) -> i32 {
    %c0_i32 = arith.constant 0 : i32
    %c0_i32_0 = arith.constant 0 : i32
    return %c0_i32 : i32
  }
  func.func @transform_7(%arg0: i32) -> (i32, i32) {
    %c0_i32 = arith.constant 0 : i32
    %c0_i32_0 = arith.constant 0 : i32
    return %c0_i32, %arg0 : i32, i32
  }
}

</mosaic_0001>

<llo_original>
// kernel: tpu_custom_call.1
$region0: #{tpu_custom_call.1}
  #allocation0 [shape = 'u32[]', space=smem, size = 0x4, offset = 0x4, fixed_abs, tag = 'smem constant byte address 0x4 - core index']
  #allocation1 [shape = 'u32[72,128]{1,0:T(1,128)}', space=vmem, size = 0x9000, scoped, tag = 'internal scratch']
  #allocation2 [shape = 'f32[1]{0:T(128)S(6)}', space=smem, size = 0x200, scoped, tag = 'scoped memory for tpu_custom_call.1']
  %s0 = inlined_call_operand.vmem [shape: f32[128,32], index: 0, kind: input, shape index: {}]
  %s1 = inlined_call_operand.vmem [shape: bf16[32,256], index: 1, kind: input, shape index: {}]
  %s2 = inlined_call_operand.vmem [shape: f32[1,256], index: 2, kind: input, shape index: {}]
  %s3 = inlined_call_operand.vmem [shape: bf16[256,128], index: 3, kind: input, shape index: {}]
  %s4 = inlined_call_operand.vmem [shape: f32[1,128], index: 4, kind: input, shape index: {}]
  %s5 = inlined_call_operand.vmem [shape: f32[1,128], index: 5, kind: input, shape index: {}]
  %s6 = inlined_call_operand.<no memory space> [shape: f32[1], index: 6, kind: input, shape index: {}]
  %s7 = inlined_call_operand.hbm [shape: f32[1,128], index: 7, kind: output, shape index: {}]
  %s8 = sld [smem:[#allocation0]]
  $region38: #{tpu_custom_call.1} parent=0
    _
  %s10 = ssub.s32 1, %s8
  %s11 = scalar_select 0, %s10, %s8
  %12 = sst [smem:[#allocation2]] %s6
  $region1: #{tpu_custom_call.1} parent=0
    #allocation3 [shape = 'u8[512]{0}', space=vmem, size = 0x400, scoped, tag = 'output window, operand 0, single buffered']
    #allocation4 [shape = 's32[1]{0}', space=sflag, size = 0x4, scoped, tag = 'scoped memory for tpu_custom_call.1']
    %13 = vsyncpa [#allocation4], 0
    // Predicated region
    $region2: #{tpu_custom_call.1} parent=1 // pred_check
      _
    $region3: #{tpu_custom_call.1} parent=1 // pred_check_branch
      %15 = sbr.rel (0) target = $region5
    $region4: #{tpu_custom_call.1} parent=1 // pred_region
      _
    $region5: #{tpu_custom_call.1} parent=1 // pred_fallthru
      _
    // Predicated region
    $region6: #{tpu_custom_call.1} parent=1 // pred_check
      _
    $region7: #{tpu_custom_call.1} parent=1 // pred_check_branch
      %17 = sbr.rel (0) target = $region9
    $region8: #{tpu_custom_call.1} parent=1 // pred_region
      _
    $region9: #{tpu_custom_call.1} parent=1 // pred_fallthru
      _
    // Predicated region
    $region10: #{tpu_custom_call.1} parent=1 // pred_check
      _
    $region11: #{tpu_custom_call.1} parent=1 // pred_check_branch
      %19 = sbr.rel (0) target = $region13
    $region12: #{tpu_custom_call.1} parent=1 // pred_region
      _
    $region13: #{tpu_custom_call.1} parent=1 // pred_fallthru
      _
    // Predicated region
    $region14: #{tpu_custom_call.1} parent=1 // pred_check
      _
    $region15: #{tpu_custom_call.1} parent=1 // pred_check_branch
      %21 = sbr.rel (0) target = $region17
    $region16: #{tpu_custom_call.1} parent=1 // pred_region
      _
    $region17: #{tpu_custom_call.1} parent=1 // pred_fallthru
      _
    // Predicated region
    $region18: #{tpu_custom_call.1} parent=1 // pred_check
      _
    $region19: #{tpu_custom_call.1} parent=1 // pred_check_branch
      %23 = sbr.rel (0) target = $region21
    $region20: #{tpu_custom_call.1} parent=1 // pred_region
      _
    $region21: #{tpu_custom_call.1} parent=1 // pred_fallthru
      _
    // Predicated region
    $region22: #{tpu_custom_call.1} parent=1 // pred_check
      _
    $region23: #{tpu_custom_call.1} parent=1 // pred_check_branch
      %25 = sbr.rel (0) target = $region25
    $region24: #{tpu_custom_call.1} parent=1 // pred_region
      _
    $region25: #{tpu_custom_call.1} parent=1 // pred_fallthru
      _
    // Predicated region
    $region26: #{tpu_custom_call.1} parent=1 // pred_check
      _
    $region27: #{tpu_custom_call.1} parent=1 // pred_check_branch
      %27 = sbr.rel (0) target = $region29
    $region28: #{tpu_custom_call.1} parent=1 // pred_region
      _
    $region29: #{tpu_custom_call.1} parent=1 // pred_fallthru
      _
    %v29 = vld [vmem:[%s0] sm:$0xff]
    %v30 = vld [vmem:[%s0 + $0x8] sm:$0xff]
    %v31 = vld [vmem:[%s0 + $0x10] sm:$0xff]
    %v32 = vld [vmem:[%s0 + $0x18] sm:$0xff]
    %v33 = vld [vmem:[%s0 + $0x20] sm:$0xff]
    %v34 = vld [vmem:[%s0 + $0x28] sm:$0xff]
    %v35 = vld [vmem:[%s0 + $0x30] sm:$0xff]
    %v36 = vld [vmem:[%s0 + $0x38] sm:$0xff]
    %v37 = vld [vmem:[%s0 + $0x40] sm:$0xff]
    %v38 = vld [vmem:[%s0 + $0x48] sm:$0xff]
    %v39 = vld [vmem:[%s0 + $0x50] sm:$0xff]
    %v40 = vld [vmem:[%s0 + $0x58] sm:$0xff]
    %v41 = vld [vmem:[%s0 + $0x60] sm:$0xff]
    %v42 = vld [vmem:[%s0 + $0x68] sm:$0xff]
    %v43 = vld [vmem:[%s0 + $0x70] sm:$0xff]
    %v44 = vld [vmem:[%s0 + $0x78] sm:$0xff]
    %v45 = vpack.c.bf16 %v30, %v29
    %v46 = vpack.c.bf16 %v32, %v31
    %v47 = vpack.c.bf16 %v34, %v33
    %v48 = vpack.c.bf16 %v36, %v35
    %v49 = vpack.c.bf16 %v38, %v37
    %v50 = vpack.c.bf16 %v40, %v39
    %v51 = vpack.c.bf16 %v42, %v41
    %v52 = vpack.c.bf16 %v44, %v43
    %v53 = vld [vmem:[%s1] sm:$0xff]
    %v54 = vld [vmem:[%s1 + $0x8] sm:$0xff]
    %v55 = vld [vmem:[%s1 + $0x10] sm:$0xff]
    %v56 = vld [vmem:[%s1 + $0x18] sm:$0xff]
    %v57 = vld [vmem:[%s2] sm:$0x3]
    %v59 = vperm.slane %v57, 0
    %v60 = vperm.slane %v57, 1
    %v67 = vunpack.c.l.b16 %v53
    %v68 = vunpack.c.h.b16 %v53
    %v69 = vunpack.c.l.b16 %v54
    %v70 = vunpack.c.h.b16 %v54
    %v71 = vunpack.c.l.b16 %v55
    %v72 = vunpack.c.h.b16 %v55
    %v73 = vunpack.c.l.b16 %v56
    %v74 = vunpack.c.h.b16 %v56
    %v75 = vpack.c.b16 %v69, %v67
    %v76 = vpack.c.b16 %v70, %v68
    %v77 = vpack.c.b16 %v73, %v71
    %v78 = vpack.c.b16 %v74, %v72
    %vm83 = vcmask 261120
    %v85 = vsel %vm83, %v45, 0
    %v88 = vsel %vm83, %v46, 0
    %v91 = vsel %vm83, %v47, 0
    %v94 = vsel %vm83, %v48, 0
    %v97 = vsel %vm83, %v49, 0
    %v100 = vsel %vm83, %v50, 0
    %v103 = vsel %vm83, %v51, 0
    %v106 = vsel %vm83, %v52, 0
    %108 = vmatpush.bf16.msra.mxu0 0
    %109 = vmatpush.bf16.msra.mxu0 0
    %110 = vmatpush.bf16.msra.mxu0 0
    %111 = vmatpush.bf16.msra.mxu0 0
    %112 = vmatpush.bf16.msra.mxu0 0
    %113 = vmatpush.bf16.msra.mxu0 0
    %114 = vmatpush.bf16.msra.mxu0 %v77
    %115 = vmatpush.bf16.msra.mxu0 %v75
    %116 = vmatmul.bf16.gmra.mxu0 %v85
    %v117 = vpop.f32.mrf.mxu0
    %v118 = vadd.f32 %v59, %v117
    %v119 = vpop.f32.mrf.mxu0
    %v120 = vadd.f32 %v59, %v119
    %121 = vmatmul.bf16.gmra.mxu0 %v88
    %v122 = vpop.f32.mrf.mxu0
    %v123 = vadd.f32 %v59, %v122
    %v124 = vpop.f32.mrf.mxu0
    %v125 = vadd.f32 %v59, %v124
    %126 = vmatmul.bf16.gmra.mxu0 %v91
    %v127 = vpop.f32.mrf.mxu0
    %v128 = vadd.f32 %v59, %v127
    %v129 = vpop.f32.mrf.mxu0
    %v130 = vadd.f32 %v59, %v129
    %131 = vmatmul.bf16.gmra.mxu0 %v94
    %v132 = vpop.f32.mrf.mxu0
    %v133 = vadd.f32 %v59, %v132
    %v134 = vpop.f32.mrf.mxu0
    %v135 = vadd.f32 %v59, %v134
    %136 = vmatmul.bf16.gmra.mxu0 %v97
    %v137 = vpop.f32.mrf.mxu0
    %v138 = vadd.f32 %v59, %v137
    %v139 = vpop.f32.mrf.mxu0
    %v140 = vadd.f32 %v59, %v139
    %141 = vmatmul.bf16.gmra.mxu0 %v100
    %v142 = vpop.f32.mrf.mxu0
    %v143 = vadd.f32 %v59, %v142
    %v144 = vpop.f32.mrf.mxu0
    %v145 = vadd.f32 %v59, %v144
    %146 = vmatmul.bf16.gmra.mxu0 %v103
    %v147 = vpop.f32.mrf.mxu0
    %v148 = vadd.f32 %v59, %v147
    %v149 = vpop.f32.mrf.mxu0
    %v150 = vadd.f32 %v59, %v149
    %151 = vmatmul.bf16.gmra.mxu0 %v106
    %v152 = vpop.f32.mrf.mxu0
    %v153 = vadd.f32 %v59, %v152
    %v154 = vpop.f32.mrf.mxu0
    %v155 = vadd.f32 %v59, %v154
    %156 = vdwg.mxu0
    %157 = vmatpush.bf16.msra.mxu0 0
    %158 = vmatpush.bf16.msra.mxu0 0
    %159 = vmatpush.bf16.msra.mxu0 0
    %160 = vmatpush.bf16.msra.mxu0 0
    %161 = vmatpush.bf16.msra.mxu0 0
    %162 = vmatpush.bf16.msra.mxu0 0
    %163 = vmatpush.bf16.msra.mxu0 %v78
    %164 = vmatpush.bf16.msra.mxu0 %v76
    %165 = vmatmul.bf16.gmra.mxu0 %v85
    %v166 = vpop.f32.mrf.mxu0
    %v167 = vadd.f32 %v60, %v166
    %v168 = vpop.f32.mrf.mxu0
    %v169 = vadd.f32 %v60, %v168
    %170 = vmatmul.bf16.gmra.mxu0 %v88
    %v171 = vpop.f32.mrf.mxu0
    %v172 = vadd.f32 %v60, %v171
    %v173 = vpop.f32.mrf.mxu0
    %v174 = vadd.f32 %v60, %v173
    %175 = vmatmul.bf16.gmra.mxu0 %v91
    %v176 = vpop.f32.mrf.mxu0
    %v177 = vadd.f32 %v60, %v176
    %v178 = vpop.f32.mrf.mxu0
    %v179 = vadd.f32 %v60, %v178
    %180 = vmatmul.bf16.gmra.mxu0 %v94
    %v181 = vpop.f32.mrf.mxu0
    %v182 = vadd.f32 %v60, %v181
    %v183 = vpop.f32.mrf.mxu0
    %v184 = vadd.f32 %v60, %v183
    %185 = vmatmul.bf16.gmra.mxu0 %v97
    %v186 = vpop.f32.mrf.mxu0
    %v187 = vadd.f32 %v60, %v186
    %v188 = vpop.f32.mrf.mxu0
    %v189 = vadd.f32 %v60, %v188
    %190 = vmatmul.bf16.gmra.mxu0 %v100
    %v191 = vpop.f32.mrf.mxu0
    %v192 = vadd.f32 %v60, %v191
    %v193 = vpop.f32.mrf.mxu0
    %v194 = vadd.f32 %v60, %v193
    %195 = vmatmul.bf16.gmra.mxu0 %v103
    %v196 = vpop.f32.mrf.mxu0
    %v197 = vadd.f32 %v60, %v196
    %v198 = vpop.f32.mrf.mxu0
    %v199 = vadd.f32 %v60, %v198
    %200 = vmatmul.bf16.gmra.mxu0 %v106
    %v201 = vpop.f32.mrf.mxu0
    %v202 = vadd.f32 %v60, %v201
    %v203 = vpop.f32.mrf.mxu0
    %v204 = vadd.f32 %v60, %v203
    %205 = vdwg.mxu0
    %v206 = vmax.f32 %v118, 0.0
    %v207 = vmax.f32 %v167, 0.0
    %v208 = vmax.f32 %v120, 0.0
    %v209 = vmax.f32 %v169, 0.0
    %v210 = vmax.f32 %v123, 0.0
    %v211 = vmax.f32 %v172, 0.0
    %v212 = vmax.f32 %v125, 0.0
    %v213 = vmax.f32 %v174, 0.0
    %v214 = vmax.f32 %v128, 0.0
    %v215 = vmax.f32 %v177, 0.0
    %v216 = vmax.f32 %v130, 0.0
    %v217 = vmax.f32 %v179, 0.0
    %v218 = vmax.f32 %v133, 0.0
    %v219 = vmax.f32 %v182, 0.0
    %v220 = vmax.f32 %v135, 0.0
    %v221 = vmax.f32 %v184, 0.0
    %v222 = vmax.f32 %v138, 0.0
    %v223 = vmax.f32 %v187, 0.0
    %v224 = vmax.f32 %v140, 0.0
    %v225 = vmax.f32 %v189, 0.0
    %v226 = vmax.f32 %v143, 0.0
    %v227 = vmax.f32 %v192, 0.0
    %v228 = vmax.f32 %v145, 0.0
    %v229 = vmax.f32 %v194, 0.0
    %v230 = vmax.f32 %v148, 0.0
    %v231 = vmax.f32 %v197, 0.0
    %v232 = vmax.f32 %v150, 0.0
    %v233 = vmax.f32 %v199, 0.0
    %v234 = vmax.f32 %v153, 0.0
    %v235 = vmax.f32 %v202, 0.0
    %v236 = vmax.f32 %v155, 0.0
    %v237 = vmax.f32 %v204, 0.0
    %v238 = vpack.c.bf16 %v208, %v206
    %v239 = vpack.c.bf16 %v209, %v207
    %v240 = vpack.c.bf16 %v212, %v210
    %v241 = vpack.c.bf16 %v213, %v211
    %v242 = vpack.c.bf16 %v216, %v214
    %v243 = vpack.c.bf16 %v217, %v215
    %v244 = vpack.c.bf16 %v220, %v218
    %v245 = vpack.c.bf16 %v221, %v219
    %v246 = vpack.c.bf16 %v224, %v222
    %v247 = vpack.c.bf16 %v225, %v223
    %v248 = vpack.c.bf16 %v228, %v226
    %v249 = vpack.c.bf16 %v229, %v227
    %v250 = vpack.c.bf16 %v232, %v230
    %v251 = vpack.c.bf16 %v233, %v231
    %v252 = vpack.c.bf16 %v236, %v234
    %v253 = vpack.c.bf16 %v237, %v235
    %v254 = vld [vmem:[%s3] sm:$0xf]
    %v255 = vld [vmem:[%s3 + $0x4] sm:$0xf]
    %v256 = vld [vmem:[%s3 + $0x8] sm:$0xf]
    %v257 = vld [vmem:[%s3 + $0xc] sm:$0xf]
    %v258 = vld [vmem:[%s3 + $0x10] sm:$0xf]
    %v259 = vld [vmem:[%s3 + $0x14] sm:$0xf]
    %v260 = vld [vmem:[%s3 + $0x18] sm:$0xf]
    %v261 = vld [vmem:[%s3 + $0x1c] sm:$0xf]
    %v262 = vld [vmem:[%s3 + $0x20] sm:$0xf]
    %v263 = vld [vmem:[%s3 + $0x24] sm:$0xf]
    %v264 = vld [vmem:[%s3 + $0x28] sm:$0xf]
    %v265 = vld [vmem:[%s3 + $0x2c] sm:$0xf]
    %v266 = vld [vmem:[%s3 + $0x30] sm:$0xf]
    %v267 = vld [vmem:[%s3 + $0x34] sm:$0xf]
    %v268 = vld [vmem:[%s3 + $0x38] sm:$0xf]
    %v269 = vld [vmem:[%s3 + $0x3c] sm:$0xf]
    %v270 = vld [vmem:[%s3 + $0x40] sm:$0xf]
    %v271 = vld [vmem:[%s3 + $0x44] sm:$0xf]
    %v272 = vld [vmem:[%s3 + $0x48] sm:$0xf]
    %v273 = vld [vmem:[%s3 + $0x4c] sm:$0xf]
    %v274 = vld [vmem:[%s3 + $0x50] sm:$0xf]
    %v275 = vld [vmem:[%s3 + $0x54] sm:$0xf]
    %v276 = vld [vmem:[%s3 + $0x58] sm:$0xf]
    %v277 = vld [vmem:[%s3 + $0x5c] sm:$0xf]
    %v278 = vld [vmem:[%s3 + $0x60] sm:$0xf]
    %v279 = vld [vmem:[%s3 + $0x64] sm:$0xf]
    %v280 = vld [vmem:[%s3 + $0x68] sm:$0xf]
    %v281 = vld [vmem:[%s3 + $0x6c] sm:$0xf]
    %v282 = vld [vmem:[%s3 + $0x70] sm:$0xf]
    %v283 = vld [vmem:[%s3 + $0x74] sm:$0xf]
    %v284 = vld [vmem:[%s3 + $0x78] sm:$0xf]
    %v285 = vld [vmem:[%s3 + $0x7c] sm:$0xf]
    %v286 = vld [vmem:[%s4] sm:$0x1]
    %v288 = vperm.slane %v286, 0
    %v322 = vunpack.c.l.b16 %v254
    %v323 = vunpack.c.l.b16 %v255
    %v324 = vunpack.c.l.b16 %v256
    %v325 = vunpack.c.l.b16 %v257
    %v326 = vunpack.c.l.b16 %v258
    %v327 = vunpack.c.l.b16 %v259
    %v328 = vunpack.c.l.b16 %v260
    %v329 = vunpack.c.l.b16 %v261
    %v330 = vunpack.c.l.b16 %v262
    %v331 = vunpack.c.l.b16 %v263
    %v332 = vunpack.c.l.b16 %v264
    %v333 = vunpack.c.l.b16 %v265
    %v334 = vunpack.c.l.b16 %v266
    %v335 = vunpack.c.l.b16 %v267
    %v336 = vunpack.c.l.b16 %v268
    %v337 = vunpack.c.l.b16 %v269
    %v338 = vunpack.c.l.b16 %v270
    %v339 = vunpack.c.l.b16 %v271
    %v340 = vunpack.c.l.b16 %v272
    %v341 = vunpack.c.l.b16 %v273
    %v342 = vunpack.c.l.b16 %v274
    %v343 = vunpack.c.l.b16 %v275
    %v344 = vunpack.c.l.b16 %v276
    %v345 = vunpack.c.l.b16 %v277
    %v346 = vunpack.c.l.b16 %v278
    %v347 = vunpack.c.l.b16 %v279
    %v348 = vunpack.c.l.b16 %v280
    %v349 = vunpack.c.l.b16 %v281
    %v350 = vunpack.c.l.b16 %v282
    %v351 = vunpack.c.l.b16 %v283
    %v352 = vunpack.c.l.b16 %v284
    %v353 = vunpack.c.l.b16 %v285
    %v354 = vpack.c.b16 %v323, %v322
    %v355 = vpack.c.b16 %v325, %v324
    %v356 = vpack.c.b16 %v327, %v326
    %v357 = vpack.c.b16 %v329, %v328
    %v358 = vpack.c.b16 %v331, %v330
    %v359 = vpack.c.b16 %v333, %v332
    %v360 = vpack.c.b16 %v335, %v334
    %v361 = vpack.c.b16 %v337, %v336
    %v362 = vpack.c.b16 %v339, %v338
    %v363 = vpack.c.b16 %v341, %v340
    %v364 = vpack.c.b16 %v343, %v342
    %v365 = vpack.c.b16 %v345, %v344
    %v366 = vpack.c.b16 %v347, %v346
    %v367 = vpack.c.b16 %v349, %v348
    %v368 = vpack.c.b16 %v351, %v350
    %v369 = vpack.c.b16 %v353, %v352
    %386 = vmatpush.bf16.msra.mxu0 %v361
    %387 = vmatpush.bf16.msra.mxu0 %v360
    %388 = vmatpush.bf16.msra.mxu0 %v359
    %389 = vmatpush.bf16.msra.mxu0 %v358
    %390 = vmatpush.bf16.msra.mxu0 %v357
    %391 = vmatpush.bf16.msra.mxu0 %v356
    %392 = vmatpush.bf16.msra.mxu0 %v355
    %393 = vmatpush.bf16.msra.mxu0 %v354
    %394 = vmatmul.bf16.gmra.mxu0 %v238
    %v395 = vpop.f32.mrf.mxu0
    %v396 = vadd.f32 %v288, %v395
    %v397 = vpop.f32.mrf.mxu0
    %v398 = vadd.f32 %v288, %v397
    %399 = vmatmul.bf16.gmra.mxu0 %v240
    %v400 = vpop.f32.mrf.mxu0
    %v401 = vadd.f32 %v288, %v400
    %v402 = vpop.f32.mrf.mxu0
    %v403 = vadd.f32 %v288, %v402
    %404 = vmatmul.bf16.gmra.mxu0 %v242
    %v405 = vpop.f32.mrf.mxu0
    %v406 = vadd.f32 %v288, %v405
    %v407 = vpop.f32.mrf.mxu0
    %v408 = vadd.f32 %v288, %v407
    %409 = vmatmul.bf16.gmra.mxu0 %v244
    %v410 = vpop.f32.mrf.mxu0
    %v411 = vadd.f32 %v288, %v410
    %v412 = vpop.f32.mrf.mxu0
    %v413 = vadd.f32 %v288, %v412
    %414 = vmatmul.bf16.gmra.mxu0 %v246
    %v415 = vpop.f32.mrf.mxu0
    %v416 = vadd.f32 %v288, %v415
    %v417 = vpop.f32.mrf.mxu0
    %v418 = vadd.f32 %v288, %v417
    %419 = vmatmul.bf16.gmra.mxu0 %v248
    %v420 = vpop.f32.mrf.mxu0
    %v421 = vadd.f32 %v288, %v420
    %v422 = vpop.f32.mrf.mxu0
    %v423 = vadd.f32 %v288, %v422
    %424 = vmatmul.bf16.gmra.mxu0 %v250
    %v425 = vpop.f32.mrf.mxu0
    %v426 = vadd.f32 %v288, %v425
    %v427 = vpop.f32.mrf.mxu0
    %v428 = vadd.f32 %v288, %v427
    %429 = vmatmul.bf16.gmra.mxu0 %v252
    %v430 = vpop.f32.mrf.mxu0
    %v431 = vadd.f32 %v288, %v430
    %v432 = vpop.f32.mrf.mxu0
    %v433 = vadd.f32 %v288, %v432
    %434 = vdwg.mxu0
    %435 = vmatpush.bf16.msra.mxu0 %v369
    %436 = vmatpush.bf16.msra.mxu0 %v368
    %437 = vmatpush.bf16.msra.mxu0 %v367
    %438 = vmatpush.bf16.msra.mxu0 %v366
    %439 = vmatpush.bf16.msra.mxu0 %v365
    %440 = vmatpush.bf16.msra.mxu0 %v364
    %441 = vmatpush.bf16.msra.mxu0 %v363
    %442 = vmatpush.bf16.msra.mxu0 %v362
    %443 = vmatmul.bf16.gmra.mxu0 %v239
    %v444 = vpop.f32.mrf.mxu0
    %v445 = vadd.f32 %v396, %v444
    %v446 = vpop.f32.mrf.mxu0
    %v447 = vadd.f32 %v398, %v446
    %448 = vmatmul.bf16.gmra.mxu0 %v241
    %v449 = vpop.f32.mrf.mxu0
    %v450 = vadd.f32 %v401, %v449
    %v451 = vpop.f32.mrf.mxu0
    %v452 = vadd.f32 %v403, %v451
    %453 = vmatmul.bf16.gmra.mxu0 %v243
    %v454 = vpop.f32.mrf.mxu0
    %v455 = vadd.f32 %v406, %v454
    %v456 = vpop.f32.mrf.mxu0
    %v457 = vadd.f32 %v408, %v456
    %458 = vmatmul.bf16.gmra.mxu0 %v245
    %v459 = vpop.f32.mrf.mxu0
    %v460 = vadd.f32 %v411, %v459
    %v461 = vpop.f32.mrf.mxu0
    %v462 = vadd.f32 %v413, %v461
    %463 = vmatmul.bf16.gmra.mxu0 %v247
    %v464 = vpop.f32.mrf.mxu0
    %v465 = vadd.f32 %v416, %v464
    %v466 = vpop.f32.mrf.mxu0
    %v467 = vadd.f32 %v418, %v466
    %468 = vmatmul.bf16.gmra.mxu0 %v249
    %v469 = vpop.f32.mrf.mxu0
    %v470 = vadd.f32 %v421, %v469
    %v471 = vpop.f32.mrf.mxu0
    %v472 = vadd.f32 %v423, %v471
    %473 = vmatmul.bf16.gmra.mxu0 %v251
    %v474 = vpop.f32.mrf.mxu0
    %v475 = vadd.f32 %v426, %v474
    %v476 = vpop.f32.mrf.mxu0
    %v477 = vadd.f32 %v428, %v476
    %478 = vmatmul.bf16.gmra.mxu0 %v253
    %v479 = vpop.f32.mrf.mxu0
    %v480 = vadd.f32 %v431, %v479
    %v481 = vpop.f32.mrf.mxu0
    %v482 = vadd.f32 %v433, %v481
    %483 = vdwg.mxu0
    %v484 = vmax.f32 %v445, 0.0
    %v485 = vmax.f32 %v447, 0.0
    %v486 = vmax.f32 %v450, 0.0
    %v487 = vmax.f32 %v452, 0.0
    %v488 = vmax.f32 %v455, 0.0
    %v489 = vmax.f32 %v457, 0.0
    %v490 = vmax.f32 %v460, 0.0
    %v491 = vmax.f32 %v462, 0.0
    %v492 = vmax.f32 %v465, 0.0
    %v493 = vmax.f32 %v467, 0.0
    %v494 = vmax.f32 %v470, 0.0
    %v495 = vmax.f32 %v472, 0.0
    %v496 = vmax.f32 %v475, 0.0
    %v497 = vmax.f32 %v477, 0.0
    %v498 = vmax.f32 %v480, 0.0
    %v499 = vmax.f32 %v482, 0.0
    %v500 = vld [vmem:[%s5] sm:$0x1]
    %v502 = vperm.slane %v500, 0
    %v504 = vmul.f32 %v484, %v502
    %v505 = vmul.f32 %v485, %v502
    %v506 = vmul.f32 %v486, %v502
    %v507 = vmul.f32 %v487, %v502
    %v508 = vmul.f32 %v488, %v502
    %v509 = vmul.f32 %v489, %v502
    %v510 = vmul.f32 %v490, %v502
    %v511 = vmul.f32 %v491, %v502
    %v512 = vmul.f32 %v492, %v502
    %v513 = vmul.f32 %v493, %v502
    %v514 = vmul.f32 %v494, %v502
    %v515 = vmul.f32 %v495, %v502
    %v516 = vmul.f32 %v496, %v502
    %v517 = vmul.f32 %v497, %v502
    %v518 = vmul.f32 %v498, %v502
    %v519 = vmul.f32 %v499, %v502
    %520 = vadd.xlane.f32.xlu0 %v504
    %v521 = vpop.xlane.xlu0 %520
    %522 = vadd.xlane.f32.xlu0 %v505
    %v523 = vpop.xlane.xlu0 %522
    %524 = vadd.xlane.f32.xlu0 %v506
    %v525 = vpop.xlane.xlu0 %524
    %526 = vadd.xlane.f32.xlu0 %v507
    %v527 = vpop.xlane.xlu0 %526
    %528 = vadd.xlane.f32.xlu0 %v508
    %v529 = vpop.xlane.xlu0 %528
    %530 = vadd.xlane.f32.xlu0 %v509
    %v531 = vpop.xlane.xlu0 %530
    %532 = vadd.xlane.f32.xlu0 %v510
    %v533 = vpop.xlane.xlu0 %532
    %534 = vadd.xlane.f32.xlu0 %v511
    %v535 = vpop.xlane.xlu0 %534
    %536 = vadd.xlane.f32.xlu0 %v512
    %v537 = vpop.xlane.xlu0 %536
    %538 = vadd.xlane.f32.xlu0 %v513
    %v539 = vpop.xlane.xlu0 %538
    %540 = vadd.xlane.f32.xlu0 %v514
    %v541 = vpop.xlane.xlu0 %540
    %542 = vadd.xlane.f32.xlu0 %v515
    %v543 = vpop.xlane.xlu0 %542
    %544 = vadd.xlane.f32.xlu0 %v516
    %v545 = vpop.xlane.xlu0 %544
    %546 = vadd.xlane.f32.xlu0 %v517
    %v547 = vpop.xlane.xlu0 %546
    %548 = vadd.xlane.f32.xlu0 %v518
    %v549 = vpop.xlane.xlu0 %548
    %550 = vadd.xlane.f32.xlu0 %v519
    %v551 = vpop.xlane.xlu0 %550
    %s552 = sld [smem:[#allocation2]]
    %v553 = vstv %s552
    %v554 = vadd.f32 %v521, %v553
    %v555 = vadd.f32 %v523, %v553
    %v556 = vadd.f32 %v525, %v553
    %v557 = vadd.f32 %v527, %v553
    %v558 = vadd.f32 %v529, %v553
    %v559 = vadd.f32 %v531, %v553
    %v560 = vadd.f32 %v533, %v553
    %v561 = vadd.f32 %v535, %v553
    %v562 = vadd.f32 %v537, %v553
    %v563 = vadd.f32 %v539, %v553
    %v564 = vadd.f32 %v541, %v553
    %v565 = vadd.f32 %v543, %v553
    %v566 = vadd.f32 %v545, %v553
    %v567 = vadd.f32 %v547, %v553
    %v568 = vadd.f32 %v549, %v553
    %v569 = vadd.f32 %v551, %v553
    %v570 = vxor.u32 %v554, 2147483648
    %v571 = vxor.u32 %v555, 2147483648
    %v572 = vxor.u32 %v556, 2147483648
    %v573 = vxor.u32 %v557, 2147483648
    %v574 = vxor.u32 %v558, 2147483648
    %v575 = vxor.u32 %v559, 2147483648
    %v576 = vxor.u32 %v560, 2147483648
    %v577 = vxor.u32 %v561, 2147483648
    %v578 = vxor.u32 %v562, 2147483648
    %v579 = vxor.u32 %v563, 2147483648
    %v580 = vxor.u32 %v564, 2147483648
    %v581 = vxor.u32 %v565, 2147483648
    %v582 = vxor.u32 %v566, 2147483648
    %v583 = vxor.u32 %v567, 2147483648
    %v584 = vxor.u32 %v568, 2147483648
    %v585 = vxor.u32 %v569, 2147483648
    %v586 = vmul.f32 %v570, 1.442695
    %v587 = vpow.pop %v586
    %v588 = vmul.f32 %v571, 1.442695
    %v589 = vpow.pop %v588
    %v590 = vmul.f32 %v572, 1.442695
    %v591 = vpow.pop %v590
    %v592 = vmul.f32 %v573, 1.442695
    %v593 = vpow.pop %v592
    %v594 = vmul.f32 %v574, 1.442695
    %v595 = vpow.pop %v594
    %v596 = vmul.f32 %v575, 1.442695
    %v597 = vpow.pop %v596
    %v598 = vmul.f32 %v576, 1.442695
    %v599 = vpow.pop %v598
    %v600 = vmul.f32 %v577, 1.442695
    %v601 = vpow.pop %v600
    %v602 = vmul.f32 %v578, 1.442695
    %v603 = vpow.pop %v602
    %v604 = vmul.f32 %v579, 1.442695
    %v605 = vpow.pop %v604
    %v606 = vmul.f32 %v580, 1.442695
    %v607 = vpow.pop %v606
    %v608 = vmul.f32 %v581, 1.442695
    %v609 = vpow.pop %v608
    %v610 = vmul.f32 %v582, 1.442695
    %v611 = vpow.pop %v610
    %v612 = vmul.f32 %v583, 1.442695
    %v613 = vpow.pop %v612
    %v614 = vmul.f32 %v584, 1.442695
    %v615 = vpow.pop %v614
    %v616 = vmul.f32 %v585, 1.442695
    %v617 = vpow.pop %v616
    %v618 = vadd.f32 %v587, 1.0
    %v619 = vadd.f32 %v589, 1.0
    %v620 = vadd.f32 %v591, 1.0
    %v621 = vadd.f32 %v593, 1.0
    %v622 = vadd.f32 %v595, 1.0
    %v623 = vadd.f32 %v597, 1.0
    %v624 = vadd.f32 %v599, 1.0
    %v625 = vadd.f32 %v601, 1.0
    %v626 = vadd.f32 %v603, 1.0
    %v627 = vadd.f32 %v605, 1.0
    %v628 = vadd.f32 %v607, 1.0
    %v629 = vadd.f32 %v609, 1.0
    %v630 = vadd.f32 %v611, 1.0
    %v631 = vadd.f32 %v613, 1.0
    %v632 = vadd.f32 %v615, 1.0
    %v633 = vadd.f32 %v617, 1.0
    %v634 = vrcp.pop %v618
    %v635 = vmul.f32 %v618, %v634
    %v636 = vsub.f32 1.0, %v635
    %v637 = vmul.f32 %v634, %v636
    %v638 = vadd.f32 %v634, %v637
    %vm639 = vweird.f32 %v618
    %vm640 = vweird.f32 %v634
    %vm641 = vmor %vm639, %vm640
    %v642 = vsel %vm641, %v634, %v638
    %v643 = vand.u32 2147483647, %v618
    %vm644 = vcmp.eq.f32.partialorder %v643, 8.507059e+37
    %v645 = vand.u32 %v618, 2147483648
    %v646 = vor.u32 1.1754944e-38, %v645
    %v647 = vsel %vm644, %v646, %v642
    %v648 = vmul.f32 1.0, %v647
    %v649 = vrcp.pop %v619
    %v650 = vmul.f32 %v619, %v649
    %v651 = vsub.f32 1.0, %v650
    %v652 = vmul.f32 %v649, %v651
    %v653 = vadd.f32 %v649, %v652
    %vm654 = vweird.f32 %v619
    %vm655 = vweird.f32 %v649
    %vm656 = vmor %vm654, %vm655
    %v657 = vsel %vm656, %v649, %v653
    %v658 = vand.u32 2147483647, %v619
    %vm659 = vcmp.eq.f32.partialorder %v658, 8.507059e+37
    %v660 = vand.u32 %v619, 2147483648
    %v661 = vor.u32 1.1754944e-38, %v660
    %v662 = vsel %vm659, %v661, %v657
    %v663 = vmul.f32 1.0, %v662
    %v664 = vrcp.pop %v620
    %v665 = vmul.f32 %v620, %v664
    %v666 = vsub.f32 1.0, %v665
    %v667 = vmul.f32 %v664, %v666
    %v668 = vadd.f32 %v664, %v667
    %vm669 = vweird.f32 %v620
    %vm670 = vweird.f32 %v664
    %vm671 = vmor %vm669, %vm670
    %v672 = vsel %vm671, %v664, %v668
    %v673 = vand.u32 2147483647, %v620
    %vm674 = vcmp.eq.f32.partialorder %v673, 8.507059e+37
    %v675 = vand.u32 %v620, 2147483648
    %v676 = vor.u32 1.1754944e-38, %v675
    %v677 = vsel %vm674, %v676, %v672
    %v678 = vmul.f32 1.0, %v677
    %v679 = vrcp.pop %v621
    %v680 = vmul.f32 %v621, %v679
    %v681 = vsub.f32 1.0, %v680
    %v682 = vmul.f32 %v679, %v681
    %v683 = vadd.f32 %v679, %v682
    %vm684 = vweird.f32 %v621
    %vm685 = vweird.f32 %v679
    %vm686 = vmor %vm684, %vm685
    %v687 = vsel %vm686, %v679, %v683
    %v688 = vand.u32 2147483647, %v621
    %vm689 = vcmp.eq.f32.partialorder %v688, 8.507059e+37
    %v690 = vand.u32 %v621, 2147483648
    %v691 = vor.u32 1.1754944e-38, %v690
    %v692 = vsel %vm689, %v691, %v687
    %v693 = vmul.f32 1.0, %v692
    %v694 = vrcp.pop %v622
    %v695 = vmul.f32 %v622, %v694
    %v696 = vsub.f32 1.0, %v695
    %v697 = vmul.f32 %v694, %v696
    %v698 = vadd.f32 %v694, %v697
    %vm699 = vweird.f32 %v622
    %vm700 = vweird.f32 %v694
    %vm701 = vmor %vm699, %vm700
    %v702 = vsel %vm701, %v694, %v698
    %v703 = vand.u32 2147483647, %v622
    %vm704 = vcmp.eq.f32.partialorder %v703, 8.507059e+37
    %v705 = vand.u32 %v622, 2147483648
    %v706 = vor.u32 1.1754944e-38, %v705
    %v707 = vsel %vm704, %v706, %v702
    %v708 = vmul.f32 1.0, %v707
    %v709 = vrcp.pop %v623
    %v710 = vmul.f32 %v623, %v709
    %v711 = vsub.f32 1.0, %v710
    %v712 = vmul.f32 %v709, %v711
    %v713 = vadd.f32 %v709, %v712
    %vm714 = vweird.f32 %v623
    %vm715 = vweird.f32 %v709
    %vm716 = vmor %vm714, %vm715
    %v717 = vsel %vm716, %v709, %v713
    %v718 = vand.u32 2147483647, %v623
    %vm719 = vcmp.eq.f32.partialorder %v718, 8.507059e+37
    %v720 = vand.u32 %v623, 2147483648
    %v721 = vor.u32 1.1754944e-38, %v720
    %v722 = vsel %vm719, %v721, %v717
    %v723 = vmul.f32 1.0, %v722
    %v724 = vrcp.pop %v624
    %v725 = vmul.f32 %v624, %v724
    %v726 = vsub.f32 1.0, %v725
    %v727 = vmul.f32 %v724, %v726
    %v728 = vadd.f32 %v724, %v727
    %vm729 = vweird.f32 %v624
    %vm730 = vweird.f32 %v724
    %vm731 = vmor %vm729, %vm730
    %v732 = vsel %vm731, %v724, %v728
    %v733 = vand.u32 2147483647, %v624
    %vm734 = vcmp.eq.f32.partialorder %v733, 8.507059e+37
    %v735 = vand.u32 %v624, 2147483648
    %v736 = vor.u32 1.1754944e-38, %v735
    %v737 = vsel %vm734, %v736, %v732
    %v738 = vmul.f32 1.0, %v737
    %v739 = vrcp.pop %v625
    %v740 = vmul.f32 %v625, %v739
    %v741 = vsub.f32 1.0, %v740
    %v742 = vmul.f32 %v739, %v741
    %v743 = vadd.f32 %v739, %v742
    %vm744 = vweird.f32 %v625
    %vm745 = vweird.f32 %v739
    %vm746 = vmor %vm744, %vm745
    %v747 = vsel %vm746, %v739, %v743
    %v748 = vand.u32 2147483647, %v625
    %vm749 = vcmp.eq.f32.partialorder %v748, 8.507059e+37
    %v750 = vand.u32 %v625, 2147483648
    %v751 = vor.u32 1.1754944e-38, %v750
    %v752 = vsel %vm749, %v751, %v747
    %v753 = vmul.f32 1.0, %v752
    %v754 = vrcp.pop %v626
    %v755 = vmul.f32 %v626, %v754
    %v756 = vsub.f32 1.0, %v755
    %v757 = vmul.f32 %v754, %v756
    %v758 = vadd.f32 %v754, %v757
    %vm759 = vweird.f32 %v626
    %vm760 = vweird.f32 %v754
    %vm761 = vmor %vm759, %vm760
    %v762 = vsel %vm761, %v754, %v758
    %v763 = vand.u32 2147483647, %v626
    %vm764 = vcmp.eq.f32.partialorder %v763, 8.507059e+37
    %v765 = vand.u32 %v626, 2147483648
    %v766 = vor.u32 1.1754944e-38, %v765
    %v767 = vsel %vm764, %v766, %v762
    %v768 = vmul.f32 1.0, %v767
    %v769 = vrcp.pop %v627
    %v770 = vmul.f32 %v627, %v769
    %v771 = vsub.f32 1.0, %v770
    %v772 = vmul.f32 %v769, %v771
    %v773 = vadd.f32 %v769, %v772
    %vm774 = vweird.f32 %v627
    %vm775 = vweird.f32 %v769
    %vm776 = vmor %vm774, %vm775
    %v777 = vsel %vm776, %v769, %v773
    %v778 = vand.u32 2147483647, %v627
    %vm779 = vcmp.eq.f32.partialorder %v778, 8.507059e+37
    %v780 = vand.u32 %v627, 2147483648
    %v781 = vor.u32 1.1754944e-38, %v780
    %v782 = vsel %vm779, %v781, %v777
    %v783 = vmul.f32 1.0, %v782
    %v784 = vrcp.pop %v628
    %v785 = vmul.f32 %v628, %v784
    %v786 = vsub.f32 1.0, %v785
    %v787 = vmul.f32 %v784, %v786
    %v788 = vadd.f32 %v784, %v787
    %vm789 = vweird.f32 %v628
    %vm790 = vweird.f32 %v784
    %vm791 = vmor %vm789, %vm790
    %v792 = vsel %vm791, %v784, %v788
    %v793 = vand.u32 2147483647, %v628
    %vm794 = vcmp.eq.f32.partialorder %v793, 8.507059e+37
    %v795 = vand.u32 %v628, 2147483648
    %v796 = vor.u32 1.1754944e-38, %v795
    %v797 = vsel %vm794, %v796, %v792
    %v798 = vmul.f32 1.0, %v797
    %v799 = vrcp.pop %v629
    %v800 = vmul.f32 %v629, %v799
    %v801 = vsub.f32 1.0, %v800
    %v802 = vmul.f32 %v799, %v801
    %v803 = vadd.f32 %v799, %v802
    %vm804 = vweird.f32 %v629
    %vm805 = vweird.f32 %v799
    %vm806 = vmor %vm804, %vm805
    %v807 = vsel %vm806, %v799, %v803
    %v808 = vand.u32 2147483647, %v629
    %vm809 = vcmp.eq.f32.partialorder %v808, 8.507059e+37
    %v810 = vand.u32 %v629, 2147483648
    %v811 = vor.u32 1.1754944e-38, %v810
    %v812 = vsel %vm809, %v811, %v807
    %v813 = vmul.f32 1.0, %v812
    %v814 = vrcp.pop %v630
    %v815 = vmul.f32 %v630, %v814
    %v816 = vsub.f32 1.0, %v815
    %v817 = vmul.f32 %v814, %v816
    %v818 = vadd.f32 %v814, %v817
    %vm819 = vweird.f32 %v630
    %vm820 = vweird.f32 %v814
    %vm821 = vmor %vm819, %vm820
    %v822 = vsel %vm821, %v814, %v818
    %v823 = vand.u32 2147483647, %v630
    %vm824 = vcmp.eq.f32.partialorder %v823, 8.507059e+37
    %v825 = vand.u32 %v630, 2147483648
    %v826 = vor.u32 1.1754944e-38, %v825
    %v827 = vsel %vm824, %v826, %v822
    %v828 = vmul.f32 1.0, %v827
    %v829 = vrcp.pop %v631
    %v830 = vmul.f32 %v631, %v829
    %v831 = vsub.f32 1.0, %v830
    %v832 = vmul.f32 %v829, %v831
    %v833 = vadd.f32 %v829, %v832
    %vm834 = vweird.f32 %v631
    %vm835 = vweird.f32 %v829
    %vm836 = vmor %vm834, %vm835
    %v837 = vsel %vm836, %v829, %v833
    %v838 = vand.u32 2147483647, %v631
    %vm839 = vcmp.eq.f32.partialorder %v838, 8.507059e+37
    %v840 = vand.u32 %v631, 2147483648
    %v841 = vor.u32 1.1754944e-38, %v840
    %v842 = vsel %vm839, %v841, %v837
    %v843 = vmul.f32 1.0, %v842
    %v844 = vrcp.pop %v632
    %v845 = vmul.f32 %v632, %v844
    %v846 = vsub.f32 1.0, %v845
    %v847 = vmul.f32 %v844, %v846
    %v848 = vadd.f32 %v844, %v847
    %vm849 = vweird.f32 %v632
    %vm850 = vweird.f32 %v844
    %vm851 = vmor %vm849, %vm850
    %v852 = vsel %vm851, %v844, %v848
    %v853 = vand.u32 2147483647, %v632
    %vm854 = vcmp.eq.f32.partialorder %v853, 8.507059e+37
    %v855 = vand.u32 %v632, 2147483648
    %v856 = vor.u32 1.1754944e-38, %v855
    %v857 = vsel %vm854, %v856, %v852
    %v858 = vmul.f32 1.0, %v857
    %v859 = vrcp.pop %v633
    %v860 = vmul.f32 %v633, %v859
    %v861 = vsub.f32 1.0, %v860
    %v862 = vmul.f32 %v859, %v861
    %v863 = vadd.f32 %v859, %v862
    %vm864 = vweird.f32 %v633
    %vm865 = vweird.f32 %v859
    %vm866 = vmor %vm864, %vm865
    %v867 = vsel %vm866, %v859, %v863
    %v868 = vand.u32 2147483647, %v633
    %vm869 = vcmp.eq.f32.partialorder %v868, 8.507059e+37
    %v870 = vand.u32 %v633, 2147483648
    %v871 = vor.u32 1.1754944e-38, %v870
    %v872 = vsel %vm869, %v871, %v867
    %v873 = vmul.f32 1.0, %v872
    %v890 = vlaneseq
    %v891 = vand.u32 %v890, 127
    %v892 = vperm.slane %v648, %v891
    %v893 = vadd.s32 %v891, 4294967288
    %v894 = vperm.slane %v663, %v893
    %vm895 = vcmask 130112
    %v896 = vsel %vm895, %v894, %v892
    %v897 = vadd.s32 %v891, 4294967280
    %v898 = vperm.slane %v678, %v897
    %vm899 = vcmask 195712
    %v900 = vsel %vm899, %v898, %v896
    %v901 = vadd.s32 %v891, 4294967272
    %v902 = vperm.slane %v693, %v901
    %vm903 = vcmask 261312
    %v904 = vsel %vm903, %v902, %v900
    %v905 = vadd.s32 %v891, 4294967264
    %v906 = vperm.slane %v708, %v905
    %vm907 = vcmask 326912
    %v908 = vsel %vm907, %v906, %v904
    %v909 = vadd.s32 %v891, 4294967256
    %v910 = vperm.slane %v723, %v909
    %vm911 = vcmask 392512
    %v912 = vsel %vm911, %v910, %v908
    %v913 = vadd.s32 %v891, 4294967248
    %v914 = vperm.slane %v738, %v913
    %vm915 = vcmask 458112
    %v916 = vsel %vm915, %v914, %v912
    %v917 = vadd.s32 %v891, 4294967240
    %v918 = vperm.slane %v753, %v917
    %vm919 = vcmask 523712
    %v920 = vsel %vm919, %v918, %v916
    %v921 = vadd.s32 %v891, 4294967232
    %v922 = vperm.slane %v768, %v921
    %vm923 = vcmask 589312
    %v924 = vsel %vm923, %v922, %v920
    %v925 = vadd.s32 %v891, 4294967224
    %v926 = vperm.slane %v783, %v925
    %vm927 = vcmask 654912
    %v928 = vsel %vm927, %v926, %v924
    %v929 = vadd.s32 %v891, 4294967216
    %v930 = vperm.slane %v798, %v929
    %vm931 = vcmask 720512
    %v932 = vsel %vm931, %v930, %v928
    %v933 = vadd.s32 %v891, 4294967208
    %v934 = vperm.slane %v813, %v933
    %vm935 = vcmask 786112
    %v936 = vsel %vm935, %v934, %v932
    %v937 = vadd.s32 %v891, 4294967200
    %v938 = vperm.slane %v828, %v937
    %vm939 = vcmask 851712
    %v940 = vsel %vm939, %v938, %v936
    %v941 = vadd.s32 %v891, 4294967192
    %v942 = vperm.slane %v843, %v941
    %vm943 = vcmask 917312
    %v944 = vsel %vm943, %v942, %v940
    %v945 = vadd.s32 %v891, 4294967184
    %v946 = vperm.slane %v858, %v945
    %vm947 = vcmask 982912
    %v948 = vsel %vm947, %v946, %v944
    %v949 = vadd.s32 %v891, 4294967176
    %v950 = vperm.slane %v873, %v949
    %vm951 = vcmask 1048512
    %v952 = vsel %vm951, %v950, %v948
    %954 = vst [vmem:[#allocation3] sm:$0x1] %v952
    // Predicated region
    $region30: #{tpu_custom_call.1} parent=1 // pred_check
      _
    $region31: #{tpu_custom_call.1} parent=1 // pred_check_branch
      %956 = sbr.rel (0) target = $region33
    $region32: #{tpu_custom_call.1} parent=1 // pred_region
      %958 = vsyncadd [#allocation4], 0
      %s960 = sshll.u32 [#allocation3], 4
      %s961 = int_to_ptr.vmem [resolvable:$true] %s960
      %s962 = sshll.u32 %s7, 4
      %s963 = int_to_ptr.hbm [resolvable:$true] %s962
      %965 = dma.vmem_to_hbm [thread:$0]  %s961, 16, %s963, [#allocation4]
    $region33: #{tpu_custom_call.1} parent=1 // pred_fallthru
      _
    // Predicated region
    $region34: #{tpu_custom_call.1} parent=1 // pred_check
      _
    $region35: #{tpu_custom_call.1} parent=1 // pred_check_branch
      %967 = sbr.rel (0) target = $region37
    $region36: #{tpu_custom_call.1} parent=1 // pred_region
      %969 = dma.done [#allocation4], 16
    $region37: #{tpu_custom_call.1} parent=1 // pred_fallthru
      _
    %970 = vsyncpa [#allocation4], 1

</llo_original>
